<compile_context>
chip_gen: v7x
topology: tpu7x:2x2x1
jax: 0.10.0
libtpu: 0.0.40
codegen_flags: <defaults>
</compile_context>

<pallas_src>
import jax
import jax.numpy as jnp
from jax.experimental import pallas as pl
from jax.experimental.pallas import tpu as pltpu


# ---------------------------------------------------------------------------
# Kernel factory (association order / channel count / batching are static)
# ---------------------------------------------------------------------------
def _make_image_kernel(l_first: bool, scale, bias, batch_second: bool):
    """Fused ConvertDtype -> Resize(bilinear as MXU matmuls) -> Normalize.

    scale/bias are per-channel python floats folded in as immediates:
        out = resize(u8_img) * scale - bias,  scale = 1/(255*std), bias = mean/std
    """
    num_c = len(scale)

    if l_first:
        def kernel(img_ref, l_ref, rt_ref, out_ref):
            # img_ref : VMEM u8  [C, Hi, Wi]
            # l_ref   : VMEM bf16[tile_ho, Hi]
            # rt_ref  : VMEM bf16[Wi, Wo]
            # out_ref : VMEM     [C, tile_ho, Wo]
            tile = l_ref.shape[0]
            l = l_ref[...]
            rt = rt_ref[...]
            # single u8 -> bf16 cast of the whole block (0..255 exact in bf16)
            x = img_ref[...].astype(jnp.bfloat16)
            # first matmul per channel (RHS differs per channel)
            ys = [jnp.dot(l, x[c], preferred_element_type=jnp.float32)
                  for c in range(num_c)]                        # (tile, Wi) f32
            if batch_second:
                # batch 2nd matmul: one Rt push, M = C*tile (sublane-aligned)
                y = jnp.concatenate(ys, axis=0).astype(jnp.bfloat16)
                z = jnp.dot(y, rt, preferred_element_type=jnp.float32)
                for c in range(num_c):
                    zc = z[c * tile:(c + 1) * tile, :]
                    out_ref[c] = (zc * scale[c] - bias[c]).astype(out_ref.dtype)
            else:
                for c in range(num_c):
                    zc = jnp.dot(ys[c].astype(jnp.bfloat16), rt,
                                 preferred_element_type=jnp.float32)
                    out_ref[c] = (zc * scale[c] - bias[c]).astype(out_ref.dtype)
        return kernel

    def kernel(img_ref, l_ref, rt_ref, out_ref):
        # img_ref : VMEM u8  [C, Hi, Wi]
        # l_ref   : VMEM bf16[Ho, Hi]
        # rt_ref  : VMEM bf16[Wi, tile_wo]
        # out_ref : VMEM     [C, Ho, tile_wo]
        tile = rt_ref.shape[1]
        l = l_ref[...]
        rt = rt_ref[...]
        x = img_ref[...].astype(jnp.bfloat16)
        ys = [jnp.dot(x[c], rt, preferred_element_type=jnp.float32)
              for c in range(num_c)]                             # (Hi, tile) f32
        if batch_second:
            # batch 2nd matmul: N = C*tile (>= 3*128) fills the 256-wide MXU
            y = jnp.concatenate(ys, axis=1).astype(jnp.bfloat16)    # (Hi, C*tile)
            z = jnp.dot(l, y, preferred_element_type=jnp.float32)   # (Ho, C*tile)
            for c in range(num_c):
                zc = z[:, c * tile:(c + 1) * tile]
                out_ref[c] = (zc * scale[c] - bias[c]).astype(out_ref.dtype)
        else:
            for c in range(num_c):
                zc = jnp.dot(l, ys[c].astype(jnp.bfloat16),
                             preferred_element_type=jnp.float32)
                out_ref[c] = (zc * scale[c] - bias[c]).astype(out_ref.dtype)
    return kernel


# ---------------------------------------------------------------------------
# Parameter setup / tiling helpers (plain Python / JAX)
# ---------------------------------------------------------------------------
def _bilinear_matrix(out_size: int, in_size: int) -> jnp.ndarray:
    """PyTorch bilinear (align_corners=False, half-pixel) as a dense matrix."""
    scale = in_size / out_size
    i = jnp.arange(out_size, dtype=jnp.float32)
    src = jnp.maximum((i + 0.5) * scale - 0.5, 0.0)
    i0 = jnp.clip(jnp.floor(src).astype(jnp.int32), 0, in_size - 1)
    i1 = jnp.minimum(i0 + 1, in_size - 1)
    w1 = src - i0.astype(jnp.float32)
    w0 = 1.0 - w1
    rows = jnp.arange(out_size)
    m = jnp.zeros((out_size, in_size), dtype=jnp.float32)
    m = m.at[rows, i0].add(w0).at[rows, i1].add(w1)
    return m


def _vmem_capacity_bytes() -> int:
    """Per-core VMEM capacity; conservative (v7x per-TC) fallback."""
    try:
        cap = int(pltpu.get_tpu_info().vmem_capacity_bytes)
        if cap > 0:
            return cap
    except Exception:
        pass
    return 64 * 1024 * 1024


def _pick_tile(extent, granule, prefer_min, want_multi, budget, footprint):
    """Largest divisor tile (multiple of `granule`, or full extent) that fits
    `budget`, preferring tiles >= prefer_min and (optionally) >= 2 steps."""
    cands = [extent]
    t = (extent // granule) * granule
    while t >= granule:
        if t != extent and extent % t == 0:
            cands.append(t)
        t -= granule
    fitting = [c for c in cands if footprint(c) <= budget]
    if not fitting:
        return min(cands)                    # best effort; checked by caller
    preferred = [c for c in fitting
                 if c >= prefer_min and (not want_multi or extent // c >= 2)]
    return max(preferred) if preferred else max(fitting)


# ---------------------------------------------------------------------------
# Compose module (Pallas-backed)
# ---------------------------------------------------------------------------
class ComposePallas:
    """Pallas port of rtdetrv2 `Compose` with a fixed deterministic op list."""
    # TODO(synk): the dynamic GLOBAL_CONFIG / torchvision registry dispatch and
    # random augmentations (RandomIoUCrop, RandomPhotometricDistort, ...) have
    # no Pallas equivalent; the op list is fixed here.

    def __init__(self, in_hw, out_hw, mean, std, policy=None,
                 out_dtype=jnp.float32):
        self.in_h, self.in_w = in_hw
        self.out_h, self.out_w = out_hw
        self.mean = jnp.asarray(mean, jnp.float32)
        self.std = jnp.asarray(std, jnp.float32)
        self.out_dtype = out_dtype

        # Fused epilogue:  (x/255 - mean)/std  ==  x * scale - bias
        self.scale = (1.0 / (255.0 * self.std)).astype(jnp.float32)
        self.bias = (self.mean / self.std).astype(jnp.float32)
        self._scale_f = tuple(float(v) for v in self.scale)
        self._bias_f = tuple(float(v) for v in self.bias)

        # bf16 interpolation matrices (f32 accumulation happens on the MXU)
        self.L = _bilinear_matrix(self.out_h, self.in_h).astype(jnp.bfloat16)
        self.Rt = _bilinear_matrix(self.out_w, self.in_w).T.astype(jnp.bfloat16)

        # Association order by FLOPs:  L first:  Ho*Wi*(Hi+Wo)
        #                              Rt first: Hi*Wo*(Wi+Ho)
        cost_l_first = self.out_h * self.in_w * (self.in_h + self.out_w)
        cost_r_first = self.in_h * self.out_w * (self.in_w + self.out_h)
        self.l_first = cost_l_first <= cost_r_first

        self.box_scale = jnp.asarray(
            [self.out_w / self.in_w, self.out_h / self.in_h], jnp.float32)
        self.policy = policy

    # -- image path ---------------------------------------------------------
    def _transform_image(self, img):
        n, c, hi, wi = img.shape
        assert (hi, wi) == (self.in_h, self.in_w)
        assert c == len(self._scale_f)
        ho, wo = self.out_h, self.out_w
        out_isz = jnp.dtype(self.out_dtype).itemsize

        cap = _vmem_capacity_bytes()
        budget = int(0.7 * cap)

        if self.l_first:
            # tiled axis is a sublane dim of the output block -> multiple of 8
            extent, granule, prefer_min = ho, 8, 8
        else:
            # tiled axis is the lane dim -> multiple of 128; prefer >= 256 so
            # the matmul N-dim fills the 256-wide MXU of v6e/v7x
            extent, granule, prefer_min = wo, 128, 256

        def footprint(tile):
            if self.l_first:
                io = c*hi*wi + tile*hi*2 + wi*wo*2 + c*tile*wo*out_isz
                scratch = c*tile*wi*6 + c*tile*wo*4 + c*hi*wi*2
            else:
                io = c*hi*wi + ho*hi*2 + wi*tile*2 + c*ho*tile*out_isz
                scratch = c*hi*tile*6 + c*ho*tile*4 + c*hi*wi*2
            return 2 * io + scratch          # in/out blocks double-buffered

        tile = _pick_tile(extent, granule, prefer_min,
                          want_multi=(n == 1),   # keep both v7x TCs busy at N=1
                          budget=budget, footprint=footprint)
        fp = footprint(tile)
        if fp > cap:
            # TODO(synk): add a contraction-axis (Hi/Wi) tiling fallback with
            # an f32 accumulator scratch for very large source frames (4K on v7x).
            raise ValueError(
                f"VMEM footprint {fp / 2**20:.1f} MiB exceeds capacity "
                f"{cap / 2**20:.1f} MiB; source image too large for this kernel")
        vmem_limit = int(min(cap, max(2 * fp, 32 << 20)))   # need + headroom

        n_tiles = extent // tile
        batch_second = (tile % granule == 0)   # aligned concat/slices only
        kernel = _make_image_kernel(self.l_first, self._scale_f, self._bias_f,
                                    batch_second)

        img_spec = pl.BlockSpec((None, c, hi, wi), lambda i, t: (i, 0, 0, 0))
        if self.l_first:
            l_spec = pl.BlockSpec((tile, hi), lambda i, t: (t, 0))
            rt_spec = pl.BlockSpec((wi, wo), lambda i, t: (0, 0))
            out_spec = pl.BlockSpec((None, c, tile, wo),
                                    lambda i, t: (i, 0, t, 0))
        else:
            l_spec = pl.BlockSpec((ho, hi), lambda i, t: (0, 0))
            rt_spec = pl.BlockSpec((wi, tile), lambda i, t: (0, t))
            out_spec = pl.BlockSpec((None, c, ho, tile),
                                    lambda i, t: (i, 0, 0, t))

        return pl.pallas_call(
            kernel,
            out_shape=jax.ShapeDtypeStruct((n, c, ho, wo), self.out_dtype),
            grid_spec=pltpu.PrefetchScalarGridSpec(
                num_scalar_prefetch=0,
                grid=(n, n_tiles),
                in_specs=[img_spec, l_spec, rt_spec],
                out_specs=out_spec),
            compiler_params=pltpu.CompilerParams(
                dimension_semantics=("parallel", "parallel"),
                vmem_limit_bytes=vmem_limit),
        )(img, self.L, self.Rt)

    # -- target path --------------------------------------------------------
    def _transform_boxes(self, boxes):
        # (NB, 4) xyxy * (sx, sy, sx, sy) — plain JAX; a pallas_call here
        # costs more in dispatch than the multiply itself.
        s = jnp.concatenate([self.box_scale, self.box_scale])
        return boxes * s[None, :]

    # -- Compose.forward ----------------------------------------------------
    def __call__(self, *inputs):
        img, target = inputs[0], inputs[1]
        out_img = self._transform_image(img)
        new_target = dict(target)
        if "boxes" in new_target:
            new_target["boxes"] = self._transform_boxes(new_target["boxes"])
        if len(inputs) > 2:
            return (out_img, new_target, inputs[2])
        return (out_img, new_target)


# ---------------------------------------------------------------------------
# Pure-JAX references (correctness checks)
# ---------------------------------------------------------------------------
def _reference_image(img, L_bf, Rt_bf, scale, bias, l_first):
    """Follows the kernel's numerical path (bf16 weights / intermediate)."""
    x = img.astype(jnp.float32)              # pixel ints are exact in bf16
    L = L_bf.astype(jnp.float32)
    Rt = Rt_bf.astype(jnp.float32)
    if l_first:
        y = jnp.einsum("ah,nchw->ncaw", L, x)
        y = y.astype(jnp.bfloat16).astype(jnp.float32)
        y = jnp.einsum("ncaw,wb->ncab", y, Rt)
    else:
        y = jnp.einsum("nchw,wb->nchb", x, Rt)
        y = y.astype(jnp.bfloat16).astype(jnp.float32)
        y = jnp.einsum("ah,nchb->ncab", L, y)
    return y * scale[None, :, None, None] - bias[None, :, None, None]


def _reference_image_f32(img, in_hw, out_hw, mean, std):
    """Exact f32 pipeline (loose sanity check on the bf16 kernel)."""
    Lf = _bilinear_matrix(out_hw[0], in_hw[0])
    Rf = _bilinear_matrix(out_hw[1], in_hw[1])
    x = img.astype(jnp.float32) / 255.0
    y = jnp.einsum("ah,nchw,wb->ncab", Lf, x, Rf.T)
    return (y - mean[None, :, None, None]) / std[None, :, None, None]


def _check(compose, img, target, extra, atol=5e-3, rtol=5e-3):
    out = compose(img, target, extra)
    out_img, out_target, out_extra = out
    jax.block_until_ready((out_img, out_target["boxes"]))

    n, c, hi, wi = img.shape
    assert out_img.shape == (n, c, compose.out_h, compose.out_w)
    assert out_img.dtype == jnp.dtype(compose.out_dtype)
    assert jnp.array_equal(out_target["labels"], target["labels"])
    assert int(out_extra) == int(extra)

    out_f32 = out_img.astype(jnp.float32)
    ref = _reference_image(img, compose.L, compose.Rt,
                           compose.scale, compose.bias, compose.l_first)
    assert jnp.allclose(out_f32, ref, atol=atol, rtol=rtol)

    ref32 = _reference_image_f32(img, (compose.in_h, compose.in_w),
                                 (compose.out_h, compose.out_w),
                                 compose.mean, compose.std)
    assert jnp.allclose(out_f32, ref32, atol=0.1, rtol=0.1)

    ref_boxes = target["boxes"] * jnp.concatenate(
        [compose.box_scale, compose.box_scale])[None, :]
    assert jnp.allclose(out_target["boxes"], ref_boxes, atol=1e-4, rtol=1e-4)


if __name__ == "__main__":
    MEAN = (0.485, 0.456, 0.406)
    STD = (0.229, 0.224, 0.225)
    N, C, NB = 2, 3, 8

    key = jax.random.PRNGKey(0)
    k1, k2, k3, k4, k5, k6 = jax.random.split(key, 6)

    # shared target
    xy1 = jax.random.uniform(k2, (NB, 2), minval=0.0, maxval=8.0)
    wh = jax.random.uniform(k3, (NB, 2), minval=1.0, maxval=8.0)
    boxes = jnp.concatenate([xy1, xy1 + wh], axis=-1).astype(jnp.float32)
    labels = jax.random.randint(k4, (NB,), 0, 80, dtype=jnp.int32)
    target = {"boxes": boxes, "labels": labels}

    # config 1: 16x16 -> 32x32  ("L first" order, channel-batched 2nd matmul)
    HI, WI, HO, WO = 16, 16, 32, 32
    img1 = jax.random.randint(k1, (N, C, HI, WI), 0, 256,
                              dtype=jnp.int32).astype(jnp.uint8)
    compose1 = ComposePallas(in_hw=(HI, WI), out_hw=(HO, WO),
                             mean=MEAN, std=STD)
    assert compose1.l_first
    _check(compose1, img1, target, jnp.int32(7))

    # config 2: asymmetric 16x24 -> 40x32 ("R^T first", narrow Wo fallback path)
    HI2, WI2, HO2, WO2 = 16, 24, 40, 32
    img2 = jax.random.randint(k5, (N, C, HI2, WI2), 0, 256,
                              dtype=jnp.int32).astype(jnp.uint8)
    compose2 = ComposePallas(in_hw=(HI2, WI2), out_hw=(HO2, WO2),
                             mean=MEAN, std=STD)
    assert not compose2.l_first
    _check(compose2, img2, target, jnp.int32(3))

    # config 3: 8x64 -> 32x256 ("R^T first", lane-aligned wide-N batched path)
    HI3, WI3, HO3, WO3 = 8, 64, 32, 256
    img3 = jax.random.randint(k6, (N, C, HI3, WI3), 0, 256,
                              dtype=jnp.int32).astype(jnp.uint8)
    compose3 = ComposePallas(in_hw=(HI3, WI3), out_hw=(HO3, WO3),
                             mean=MEAN, std=STD)
    assert not compose3.l_first
    _check(compose3, img3, target, jnp.int32(1))

    # config 4: bf16 output epilogue (halves HBM writeback); looser tolerance
    compose1b = ComposePallas(in_hw=(HI, WI), out_hw=(HO, WO),
                              mean=MEAN, std=STD, out_dtype=jnp.bfloat16)
    out_b = compose1b._transform_image(img1)
    jax.block_until_ready(out_b)
    assert out_b.dtype == jnp.bfloat16
    ref_b = _reference_image(img1, compose1b.L, compose1b.Rt,
                             compose1b.scale, compose1b.bias, compose1b.l_first)
    assert jnp.allclose(out_b.astype(jnp.float32), ref_b, atol=3e-2, rtol=3e-2)

    print("KERNEL_OK")
</pallas_src>

<mosaic_0001>
module attributes {stable_mosaic.version = 11 : i64} {
  func.func @kernel(%arg0: i32, %arg1: i32, %arg2: memref<1x3x16x16xi8, #tpu.memory_space<vmem>>, %arg3: memref<32x16xbf16, #tpu.memory_space<vmem>>, %arg4: memref<16x32xbf16, #tpu.memory_space<vmem>>, %arg5: memref<1x3x32x32xf32, #tpu.memory_space<vmem>>) attributes {dimension_semantics = [#tpu.dimension_semantics<parallel>, #tpu.dimension_semantics<parallel>], iteration_bounds = array<i64: 2, 1>, scalar_prefetch = 0 : i64, scratch_operands = 0 : i64, tpu.core_type = #tpu.core_type<tc>, window_params = [{transform_indices = @transform_0, window_bounds = array<i64: 1, 3, 16, 16>}, {transform_indices = @transform_1, window_bounds = array<i64: 32, 16>}, {pipeline_mode = #tpu.pipeline_mode<synchronous>, transform_indices = @transform_2, window_bounds = array<i64: 16, 32>}, {transform_indices = @transform_3, window_bounds = array<i64: 1, 3, 32, 32>}]} {
    %c0 = arith.constant 0 : index
    %c0_0 = arith.constant 0 : index
    %0 = vector.load %arg3[%c0, %c0_0] : memref<32x16xbf16, #tpu.memory_space<vmem>>, vector<32x16xbf16>
    %c0_1 = arith.constant 0 : index
    %c0_2 = arith.constant 0 : index
    %1 = vector.load %arg4[%c0_1, %c0_2] : memref<16x32xbf16, #tpu.memory_space<vmem>>, vector<16x32xbf16>
    %c0_3 = arith.constant 0 : index
    %c0_4 = arith.constant 0 : index
    %c0_5 = arith.constant 0 : index
    %c0_6 = arith.constant 0 : index
    %2 = vector.load %arg2[%c0_3, %c0_4, %c0_5, %c0_6] : memref<1x3x16x16xi8, #tpu.memory_space<vmem>>, vector<1x3x16x16xi8>
    %3 = vector.shape_cast %2 : vector<1x3x16x16xi8> to vector<3x16x16xi8>
    %4 = arith.uitofp %3 : vector<3x16x16xi8> to vector<3x16x16xbf16>
    %5 = vector.extract_strided_slice %4 {offsets = [0, 0, 0], sizes = [1, 16, 16], strides = [1, 1, 1]} : vector<3x16x16xbf16> to vector<1x16x16xbf16>
    %6 = vector.shape_cast %5 : vector<1x16x16xbf16> to vector<16x16xbf16>
    %cst = arith.constant dense<0.000000e+00> : vector<32x16xf32>
    %7 = tpu.matmul %0, %6, %cst {dimension_numbers = #tpu.dot_dimension_numbers<[1], [0], [0], [1], [0, 0, 1, 1], [], []>} : vector<32x16xbf16>, vector<16x16xbf16>, vector<32x16xf32> -> vector<32x16xf32>
    %8 = vector.extract_strided_slice %4 {offsets = [1, 0, 0], sizes = [1, 16, 16], strides = [1, 1, 1]} : vector<3x16x16xbf16> to vector<1x16x16xbf16>
    %9 = vector.shape_cast %8 : vector<1x16x16xbf16> to vector<16x16xbf16>
    %cst_7 = arith.constant dense<0.000000e+00> : vector<32x16xf32>
    %10 = tpu.matmul %0, %9, %cst_7 {dimension_numbers = #tpu.dot_dimension_numbers<[1], [0], [0], [1], [0, 0, 1, 1], [], []>} : vector<32x16xbf16>, vector<16x16xbf16>, vector<32x16xf32> -> vector<32x16xf32>
    %11 = vector.extract_strided_slice %4 {offsets = [2, 0, 0], sizes = [1, 16, 16], strides = [1, 1, 1]} : vector<3x16x16xbf16> to vector<1x16x16xbf16>
    %12 = vector.shape_cast %11 : vector<1x16x16xbf16> to vector<16x16xbf16>
    %cst_8 = arith.constant dense<0.000000e+00> : vector<32x16xf32>
    %13 = tpu.matmul %0, %12, %cst_8 {dimension_numbers = #tpu.dot_dimension_numbers<[1], [0], [0], [1], [0, 0, 1, 1], [], []>} : vector<32x16xbf16>, vector<16x16xbf16>, vector<32x16xf32> -> vector<32x16xf32>
    %14 = tpu.concatenate %7, %10, %13 in 0 : vector<32x16xf32>, vector<32x16xf32>, vector<32x16xf32> -> vector<96x16xf32>
    %15 = arith.truncf %14 : vector<96x16xf32> to vector<96x16xbf16>
    %cst_9 = arith.constant dense<0.000000e+00> : vector<96x32xf32>
    %16 = tpu.matmul %15, %1, %cst_9 {dimension_numbers = #tpu.dot_dimension_numbers<[1], [0], [0], [1], [0, 0, 1, 1], [], []>} : vector<96x16xbf16>, vector<16x32xbf16>, vector<96x32xf32> -> vector<96x32xf32>
    %17 = vector.extract_strided_slice %16 {offsets = [0, 0], sizes = [32, 32], strides = [1, 1]} : vector<96x32xf32> to vector<32x32xf32>
    %cst_10 = arith.constant 0.0171247534 : f32
    %18 = vector.broadcast %cst_10 : f32 to vector<32x32xf32>
    %19 = arith.mulf %17, %18 : vector<32x32xf32>
    %cst_11 = arith.constant 2.11790395 : f32
    %20 = vector.broadcast %cst_11 : f32 to vector<32x32xf32>
    %21 = arith.subf %19, %20 : vector<32x32xf32>
    %c0_12 = arith.constant 0 : index
    %c0_13 = arith.constant 0 : index
    %c0_14 = arith.constant 0 : index
    %c0_15 = arith.constant 0 : index
    %22 = vector.load %arg5[%c0_12, %c0_13, %c0_14, %c0_15] : memref<1x3x32x32xf32, #tpu.memory_space<vmem>>, vector<1x1x32x32xf32>
    %23 = vector.shape_cast %22 : vector<1x1x32x32xf32> to vector<32x32xf32>
    %24 = vector.shape_cast %21 : vector<32x32xf32> to vector<1x1x32x32xf32>
    tpu.vector_store %arg5[%c0_12, %c0_13, %c0_14, %c0_15], %24 {strides = array<i32>} : memref<1x3x32x32xf32, #tpu.memory_space<vmem>>, vector<1x1x32x32xf32>,
    %25 = vector.extract_strided_slice %16 {offsets = [32, 0], sizes = [32, 32], strides = [1, 1]} : vector<96x32xf32> to vector<32x32xf32>
    %cst_16 = arith.constant 0.0175070018 : f32
    %26 = vector.broadcast %cst_16 : f32 to vector<32x32xf32>
    %27 = arith.mulf %25, %26 : vector<32x32xf32>
    %cst_17 = arith.constant 2.03571415 : f32
    %28 = vector.broadcast %cst_17 : f32 to vector<32x32xf32>
    %29 = arith.subf %27, %28 : vector<32x32xf32>
    %c0_18 = arith.constant 0 : index
    %c1 = arith.constant 1 : index
    %c0_19 = arith.constant 0 : index
    %c0_20 = arith.constant 0 : index
    %30 = vector.load %arg5[%c0_18, %c1, %c0_19, %c0_20] : memref<1x3x32x32xf32, #tpu.memory_space<vmem>>, vector<1x1x32x32xf32>
    %31 = vector.shape_cast %30 : vector<1x1x32x32xf32> to vector<32x32xf32>
    %32 = vector.shape_cast %29 : vector<32x32xf32> to vector<1x1x32x32xf32>
    tpu.vector_store %arg5[%c0_18, %c1, %c0_19, %c0_20], %32 {strides = array<i32>} : memref<1x3x32x32xf32, #tpu.memory_space<vmem>>, vector<1x1x32x32xf32>,
    %33 = vector.extract_strided_slice %16 {offsets = [64, 0], sizes = [32, 32], strides = [1, 1]} : vector<96x32xf32> to vector<32x32xf32>
    %cst_21 = arith.constant 0.0174291935 : f32
    %34 = vector.broadcast %cst_21 : f32 to vector<32x32xf32>
    %35 = arith.mulf %33, %34 : vector<32x32xf32>
    %cst_22 = arith.constant 1.80444443 : f32
    %36 = vector.broadcast %cst_22 : f32 to vector<32x32xf32>
    %37 = arith.subf %35, %36 : vector<32x32xf32>
    %c0_23 = arith.constant 0 : index
    %c2 = arith.constant 2 : index
    %c0_24 = arith.constant 0 : index
    %c0_25 = arith.constant 0 : index
    %38 = vector.load %arg5[%c0_23, %c2, %c0_24, %c0_25] : memref<1x3x32x32xf32, #tpu.memory_space<vmem>>, vector<1x1x32x32xf32>
    %39 = vector.shape_cast %38 : vector<1x1x32x32xf32> to vector<32x32xf32>
    %40 = vector.shape_cast %37 : vector<32x32xf32> to vector<1x1x32x32xf32>
    tpu.vector_store %arg5[%c0_23, %c2, %c0_24, %c0_25], %40 {strides = array<i32>} : memref<1x3x32x32xf32, #tpu.memory_space<vmem>>, vector<1x1x32x32xf32>,
    return
  }
  func.func @transform_0(%arg0: i32, %arg1: i32) -> (i32, i32, i32, i32) {
    %c0_i32 = arith.constant 0 : i32
    %c0_i32_0 = arith.constant 0 : i32
    %c0_i32_1 = arith.constant 0 : i32
    %c0_i32_2 = arith.constant 0 : i32
    return %arg0, %c0_i32, %c0_i32_0, %c0_i32_1 : i32, i32, i32, i32
  }
  func.func @transform_1(%arg0: i32, %arg1: i32) -> (i32, i32) {
    %c0_i32 = arith.constant 0 : i32
    %c0_i32_0 = arith.constant 0 : i32
    return %arg1, %c0_i32 : i32, i32
  }
  func.func @transform_2(%arg0: i32, %arg1: i32) -> (i32, i32) {
    %c0_i32 = arith.constant 0 : i32
    %c0_i32_0 = arith.constant 0 : i32
    %c0_i32_1 = arith.constant 0 : i32
    return %c0_i32, %c0_i32_0 : i32, i32
  }
  func.func @transform_3(%arg0: i32, %arg1: i32) -> (i32, i32, i32, i32) {
    %c0_i32 = arith.constant 0 : i32
    %c0_i32_0 = arith.constant 0 : i32
    %c0_i32_1 = arith.constant 0 : i32
    return %arg0, %c0_i32, %arg1, %c0_i32_0 : i32, i32, i32, i32
  }
}

</mosaic_0001>

<llo_original>
// kernel: tpu_custom_call.1
$region0: #{tpu_custom_call.1}
  #allocation0 [shape = 'u32[]', space=smem, size = 0x4, offset = 0x4, fixed_abs, tag = 'smem constant byte address 0x4 - core index']
  #allocation1 [shape = 'u32[144,128]{1,0:T(1,128)}', space=vmem, size = 0x12000, scoped, tag = 'internal scratch']
  %s0 = inlined_call_operand.vmem [shape: u8[2,3,16,16], index: 0, kind: input, shape index: {}]
  %s1 = inlined_call_operand.vmem [shape: bf16[32,16], index: 1, kind: input, shape index: {}]
  %s2 = inlined_call_operand.hbm [shape: bf16[16,32], index: 2, kind: input, shape index: {}]
  %s3 = inlined_call_operand.hbm [shape: f32[2,3,32,32], index: 3, kind: output, shape index: {}]
  %s4 = sld [smem:[#allocation0]]
  $region49: #{tpu_custom_call.1} parent=0
    _
  %s6 = ssub.s32 1, %s4
  %s7 = scalar_select 0, %s6, %s4
  $region1: #{tpu_custom_call.1} parent=0
    #allocation2 [shape = 'u8[4096]{0}', space=vmem, size = 0x1000, scoped, tag = 'input window, operand 2, single buffered']
    #allocation3 [shape = 's32[2]{0}', space=sflag, size = 0x8, scoped, tag = 'scoped memory for tpu_custom_call.1']
    #allocation4 [shape = 's32[2]{0}', space=sflag, size = 0x8, scoped, tag = 'scoped memory for tpu_custom_call.1']
    #allocation5 [shape = 'u8[98304]{0}', space=vmem, size = 0x18000, scoped, tag = 'output window, operand 0']
    %8 = vsyncpa [#allocation3], 0
    %9 = vsyncpa [#allocation4], 0
    %s10 = scalar_lea.sflag [#allocation4], 1
    %11 = vsyncpa %s10, 0
    loop: start=0, step=1, limit=4
    $region2: #{tpu_custom_call.1} parent=1 // loop_pre_header
      _
    $region3: #{tpu_custom_call.1} parent=1 // loop_header
      %s13 = sphi 0, %s17
      %p14 = scmp.ge.s32.totalorder %s13, 4
      %s20 = sphi 0, %s32
      %s21 = sphi 0, %s28
      %s22 = sphi 0, %s20
      %s23 = sphi 0, %s21
      %s24 = sphi 0, %s22
      %s25 = sphi 0, %s23
      %s35 = sphi 0, %s37
      %s38 = sphi 0, %s35
      %s39 = sphi 0, %s38
      %s55 = sphi 0, %s39
      %s61 = sphi 0, %s63
      %s64 = sphi 0, %s61
      %s65 = sphi 0, %s64
      %s81 = sphi 0, %s65
      %s85 = sphi 0, %s85
      %s87 = sphi 0, %s85
      %s88 = sphi 0, %s87
      %s102 = sphi 0, %s88
      %s110 = sphi 0, %s112
      %s113 = sphi 0, %s110
      %s114 = sphi 0, %s113
      %s130 = sphi 0, %s114
    $region4: #{tpu_custom_call.1} parent=1 // loop_header_branch
      %16 = sbr.rel (%p14) target = $region8
    $region5: #{tpu_custom_call.1} parent=1 // loop_body
      %s18 = ssub.s32 %s13, 1
      %s19 = ssub.s32 %s13, 2
      %s26 = sadd.s32 1, %s21
      %p27 = scmp.ge.s32.totalorder %s26, 1
      %s28 = scalar_select %p27, 0, %s26
      %s29 = sadd.s32 1, %s20
      %s30 = scalar_select %p27, %s29, %s20
      %p31 = scmp.ge.s32.totalorder %s30, 2
      %s32 = scalar_select %p31, 0, %s30
      %s33 = ssub.s32 %s20, %s32
      %p34 = scmp.eq.s32.totalorder %s33, 0
      %s36 = sadd.s32 %s35, 1
      %s37 = scalar_select %p34, %s35, %s36
      %p40 = pneg %p34
      %p41 = scmp.eq.s32.totalorder %s13, 1
      %p42 = por %p40, %p41
      %p43 = scmp.ne.s32.totalorder %s35, %s38
      %p44 = scmp.eq.s32.totalorder %s13, 0
      %p45 = por %p43, %p44
      %p46 = scmp.ne.s32.totalorder %s35, %s38
      %p47 = scmp.eq.s32.totalorder %s18, 1
      %p48 = por %p46, %p47
      %p49 = scmp.ne.s32.totalorder %s38, %s39
      %p50 = scmp.eq.s32.totalorder %s18, 0
      %p51 = por %p49, %p50
      %p52 = scmp.ne.s32.totalorder %s38, %s39
      %p53 = scmp.eq.s32.totalorder %s19, 1
      %p54 = por %p52, %p53
      %p56 = scmp.ne.s32.totalorder %s39, %s55
      %p57 = scmp.eq.s32.totalorder %s19, 0
      %p58 = por %p56, %p57
      %s59 = ssub.s32 %s21, %s28
      %p60 = scmp.eq.s32.totalorder %s59, 0
      %s62 = sadd.s32 %s61, 1
      %s63 = scalar_select %p60, %s61, %s62
      %p66 = pneg %p60
      %p67 = scmp.eq.s32.totalorder %s13, 1
      %p68 = por %p66, %p67
      %p69 = scmp.ne.s32.totalorder %s61, %s64
      %p70 = scmp.eq.s32.totalorder %s13, 0
      %p71 = por %p69, %p70
      %p72 = scmp.ne.s32.totalorder %s61, %s64
      %p73 = scmp.eq.s32.totalorder %s18, 1
      %p74 = por %p72, %p73
      %p75 = scmp.ne.s32.totalorder %s64, %s65
      %p76 = scmp.eq.s32.totalorder %s18, 0
      %p77 = por %p75, %p76
      %p78 = scmp.ne.s32.totalorder %s64, %s65
      %p79 = scmp.eq.s32.totalorder %s19, 1
      %p80 = por %p78, %p79
      %p82 = scmp.ne.s32.totalorder %s65, %s81
      %p83 = scmp.eq.s32.totalorder %s19, 0
      %p84 = por %p82, %p83
      %s86 = sadd.s32 %s85, 1
      %p89 = scmp.eq.s32.totalorder %s13, 1
      %p90 = scmp.ne.s32.totalorder %s85, %s87
      %p91 = scmp.eq.s32.totalorder %s13, 0
      %p92 = por %p90, %p91
      %p93 = scmp.ne.s32.totalorder %s85, %s87
      %p94 = scmp.eq.s32.totalorder %s18, 1
      %p95 = por %p93, %p94
      %p96 = scmp.ne.s32.totalorder %s87, %s88
      %p97 = scmp.eq.s32.totalorder %s18, 0
      %p98 = por %p96, %p97
      %p99 = scmp.ne.s32.totalorder %s87, %s88
      %p100 = scmp.eq.s32.totalorder %s19, 1
      %p101 = por %p99, %p100
      %p103 = scmp.ne.s32.totalorder %s88, %s102
      %p104 = scmp.eq.s32.totalorder %s19, 0
      %p105 = por %p103, %p104
      %s106 = ssub.s32 %s20, %s32
      %s107 = ssub.s32 %s21, %s28
      %s108 = sor.u32 %s106, %s107
      %p109 = scmp.eq.s32.totalorder %s108, 0
      %s111 = sadd.s32 %s110, 1
      %s112 = scalar_select %p109, %s110, %s111
      %p115 = pneg %p109
      %p116 = scmp.eq.s32.totalorder %s13, 1
      %p117 = por %p115, %p116
      %p118 = scmp.ne.s32.totalorder %s110, %s113
      %p119 = scmp.eq.s32.totalorder %s13, 0
      %p120 = por %p118, %p119
      %p121 = scmp.ne.s32.totalorder %s110, %s113
      %p122 = scmp.eq.s32.totalorder %s18, 1
      %p123 = por %p121, %p122
      %p124 = scmp.ne.s32.totalorder %s113, %s114
      %p125 = scmp.eq.s32.totalorder %s18, 0
      %p126 = por %p124, %p125
      %p127 = scmp.ne.s32.totalorder %s113, %s114
      %p128 = scmp.eq.s32.totalorder %s19, 1
      %p129 = por %p127, %p128
      %p131 = scmp.ne.s32.totalorder %s114, %s130
      %p132 = scmp.eq.s32.totalorder %s19, 0
      %p133 = por %p131, %p132
      %p134 = scmp.le.s32.totalorder 1, %s13
      %p135 = scmp.lt.s32.totalorder %s13, 3
      %p136 = pnand %p134, %p135
      %p137 = pneg %p136
      // Predicated region
      $region9: #{tpu_custom_call.1} parent=5 // pred_check
        _
      $region10: #{tpu_custom_call.1} parent=5 // pred_check_branch
        %139 = sbr.rel (%p136) target = $region12
      $region11: #{tpu_custom_call.1} parent=5 // pred_region
        %s140 = ssub.s32 %s13, 1
        // Predicated region
        $region13: #{tpu_custom_call.1} parent=11 // pred_check
          %p141 = pneg %p77
        $region14: #{tpu_custom_call.1} parent=11 // pred_check_branch
          %143 = sbr.rel (%p141) target = $region16
        $region15: #{tpu_custom_call.1} parent=11 // pred_region
          %s144 = smul.u32 4, %s23
          %p145 = scmp.lt.s32.totalorder %s144, 3
          %s146 = scalar_select %p145, %s144, 3
          %s147 = smul.addr %s146, 4
          %s148 = scalar_lea.vmem %s1, %s147
          %s149 = smul.u32 4, %s23
        $region16: #{tpu_custom_call.1} parent=11 // pred_fallthru
          _
        // Predicated region
        $region17: #{tpu_custom_call.1} parent=11 // pred_check
          %p150 = pneg %p98
        $region18: #{tpu_custom_call.1} parent=11 // pred_check_branch
          %152 = sbr.rel (%p150) target = $region20
        $region19: #{tpu_custom_call.1} parent=11 // pred_region
          %s154 = ssub.s32 128, 128
          %155 = vsyncadd [#allocation3], %s154
          %s156 = sshll.u32 [#allocation2], 4
          %s157 = int_to_ptr.vmem [resolvable:$true] %s156
          %162 = dma.hbm_to_vmem [thread:$0]  %s2, 128, %s157, [#allocation3], 64, 64, 4
        $region20: #{tpu_custom_call.1} parent=11 // pred_fallthru
          _
      $region12: #{tpu_custom_call.1} parent=5 // pred_fallthru
        _
      %p163 = scmp.lt.s32.totalorder %s13, 2
      // Predicated region
      $region21: #{tpu_custom_call.1} parent=5 // pred_check
        %p164 = pneg %p163
      $region22: #{tpu_custom_call.1} parent=5 // pred_check_branch
        %166 = sbr.rel (%p164) target = $region24
      $region23: #{tpu_custom_call.1} parent=5 // pred_region
        // Predicated region
        $region25: #{tpu_custom_call.1} parent=23 // pred_check
          %p167 = pneg %p45
        $region26: #{tpu_custom_call.1} parent=23 // pred_check_branch
          %169 = sbr.rel (%p167) target = $region28
        $region27: #{tpu_custom_call.1} parent=23 // pred_region
          %p170 = scmp.lt.s32.totalorder %s20, 1
          %s171 = scalar_select %p170, %s20, 1
          %s172 = smul.addr %s171, 6
          %s173 = smul.addr %s172, 2
          %s174 = scalar_lea.vmem %s0, %s173
        $region28: #{tpu_custom_call.1} parent=23 // pred_fallthru
          _
      $region24: #{tpu_custom_call.1} parent=5 // pred_fallthru
        _
      %p175 = scmp.le.s32.totalorder 1, %s13
      %p176 = scmp.lt.s32.totalorder %s13, 3
      %p177 = pnand %p175, %p176
      %p178 = pneg %p177
      // Predicated region
      $region29: #{tpu_custom_call.1} parent=5 // pred_check
        _
      $region30: #{tpu_custom_call.1} parent=5 // pred_check_branch
        %180 = sbr.rel (%p177) target = $region32
      $region31: #{tpu_custom_call.1} parent=5 // pred_region
        %s181 = ssub.s32 %s13, 1
        // Predicated region
        $region33: #{tpu_custom_call.1} parent=31 // pred_check
          %p182 = pneg %p98
        $region34: #{tpu_custom_call.1} parent=31 // pred_check_branch
          %184 = sbr.rel (%p182) target = $region36
        $region35: #{tpu_custom_call.1} parent=31 // pred_region
          %185 = dma.done [#allocation3], 128
        $region36: #{tpu_custom_call.1} parent=31 // pred_fallthru
          _
        %p186 = scmp.lt.s32.totalorder %s22, 1
        %s187 = scalar_select %p186, %s22, 1
        %s188 = smul.addr %s187, 6
        %s189 = smul.addr %s188, 2
        %s190 = scalar_lea.vmem %s0, %s189
        %p191 = pneg %p51
        %p192 = pneg %p48
        %s193 = smul.u32 4, %s23
        %p194 = scmp.lt.s32.totalorder %s193, 3
        %s195 = scalar_select %p194, %s193, 3
        %s196 = smul.addr %s195, 4
        %s197 = scalar_lea.vmem %s1, %s196
        %p198 = pneg %p77
        %p199 = pneg %p74
        %p200 = pneg %p98
        %p201 = pneg %p95
        %p202 = pneg %p126
        %p203 = pneg %p123
        %s204 = sand.u32 %s113, 1
        %s205 = scalar_lea.sflag [#allocation4], %s204
        %s206 = sand.u32 %s113, 1
        %s207 = smul.addr %s206, 96
        %s208 = scalar_lea.vmem [#allocation5], %s207
        %p209 = scmp.lt.s32.totalorder %s22, 1
        %s210 = scalar_select %p209, %s22, 1
        %s211 = smul.addr %s210, 6
        %s212 = smul.addr %s211, 2
        %s213 = scalar_lea.vmem %s0, %s212
        %s214 = smul.u32 4, %s23
        %p215 = scmp.lt.s32.totalorder %s214, 3
        %s216 = scalar_select %p215, %s214, 3
        %s217 = smul.addr %s216, 4
        %s218 = scalar_lea.vmem %s1, %s217
        %s219 = smul.u32 4, %s23
        %s220 = smul.u32 4, %s23
        %v222 = vld [vmem:[%s218] sm:$0xf]
        %v223 = vld [vmem:[%s218 + $0x4] sm:$0xf]
        %v224 = vld [vmem:[%s218 + $0x8] sm:$0xf]
        %v225 = vld [vmem:[%s218 + $0xc] sm:$0xf]
        %v226 = vld [vmem:[#allocation2] sm:$0xf]
        %v227 = vld [vmem:[#allocation2 + $0x4] sm:$0xf]
        %v228 = vld [vmem:[%s213] sm:$0x3]
        %v229 = vld [vmem:[%s213 + $0x2] sm:$0x3]
        %v230 = vld [vmem:[%s213 + $0x4] sm:$0x3]
        %v231 = vld [vmem:[%s213 + $0x6] sm:$0x3]
        %v232 = vld [vmem:[%s213 + $0x8] sm:$0x3]
        %v233 = vld [vmem:[%s213 + $0xa] sm:$0x3]
        %v234 = vunpack.c.l.u8.bf16 %v228
        %v235 = vunpack.c.l.u8.bf16 %v229
        %v236 = vunpack.c.l.u8.bf16 %v230
        %v237 = vunpack.c.l.u8.bf16 %v231
        %v238 = vunpack.c.l.u8.bf16 %v232
        %v239 = vunpack.c.l.u8.bf16 %v233
        %v244 = vunpack.c.l.b16 %v222
        %v245 = vunpack.c.l.b16 %v223
        %v246 = vunpack.c.l.b16 %v224
        %v247 = vunpack.c.l.b16 %v225
        %v248 = vpack.c.b16 %v245, %v244
        %v249 = vpack.c.b16 %v247, %v246
        %v252 = vunpack.c.l.b16 %v234
        %v253 = vunpack.c.l.b16 %v235
        %v254 = vpack.c.b16 %v253, %v252
        %vm256 = vcmask 130048
        %v258 = vsel %vm256, %v248, 0
        %v261 = vsel %vm256, %v249, 0
        %263 = vmatprep.subr.bf16.mxu0 0
        %264 = vmatpush1.bf16.msra.mxu0 %v254
        %265 = vmatprep.subr.bf16.mxu0 0
        %266 = vmatpush1.bf16.msra.mxu0 0
        %267 = vmatprep.subr.bf16.mxu0 0
        %268 = vmatpush1.bf16.msra.mxu0 0
        %269 = vmatprep.subr.bf16.mxu0 0
        %270 = vmatpush1.bf16.msra.mxu0 0
        %271 = vmatprep.subr.bf16.mxu0 0
        %272 = vmatpush1.bf16.msra.mxu0 0
        %273 = vmatprep.subr.bf16.mxu0 0
        %274 = vmatpush1.bf16.msra.mxu0 0
        %275 = vmatprep.subr.bf16.mxu0 0
        %276 = vmatpush1.bf16.msra.mxu0 0
        %277 = vmatprep.subr.bf16.mxu0 0
        %278 = vmatpush1.bf16.msra.mxu0 0
        %279 = vmatprep.subr.bf16.mxu0 0
        %280 = vmatpush1.bf16.msra.mxu0 0
        %281 = vmatprep.subr.bf16.mxu0 0
        %282 = vmatpush1.bf16.msra.mxu0 0
        %283 = vmatprep.subr.bf16.mxu0 0
        %284 = vmatpush1.bf16.msra.mxu0 0
        %285 = vmatprep.subr.bf16.mxu0 0
        %286 = vmatpush1.bf16.msra.mxu0 0
        %287 = vmatprep.subr.bf16.mxu0 0
        %288 = vmatpush1.bf16.msra.mxu0 0
        %289 = vmatprep.subr.bf16.mxu0 0
        %290 = vmatpush1.bf16.msra.mxu0 0
        %291 = vmatprep.subr.bf16.mxu0 0
        %292 = vmatpush1.bf16.msra.mxu0 0
        %293 = vmatprep.subr.bf16.mxu0 0
        %294 = vmatpush1.bf16.msra.mxu0 0
        %295 = vmatprep.mubr.bf16.mxu0 0
        %296 = vmatmul.mubr.bf16.gmra.mrb[0].mxu0 %v258
        %v297 = vpop.f32.mrb[0].mxu0
        %v298 = vadd.f32 0.0, %v297
        %v299 = vpop.f32.mrb[0].mxu0
        %v300 = vpop.f32.mrb[0].mxu0
        %v301 = vadd.f32 0.0, %v300
        %v302 = vpop.f32.mrb[0].mxu0
        %303 = vmatprep.mubr.bf16.mxu0 0
        %304 = vmatmul.mubr.bf16.gmra.mrb[0].mxu0 %v261
        %v305 = vpop.f32.mrb[0].mxu0
        %v306 = vadd.f32 0.0, %v305
        %v307 = vpop.f32.mrb[0].mxu0
        %v308 = vpop.f32.mrb[0].mxu0
        %v309 = vadd.f32 0.0, %v308
        %v310 = vpop.f32.mrb[0].mxu0
        %311 = vdwg.mxu0
        %v314 = vunpack.c.l.b16 %v236
        %v315 = vunpack.c.l.b16 %v237
        %v316 = vpack.c.b16 %v315, %v314
        %318 = vmatprep.subr.bf16.mxu0 0
        %319 = vmatpush1.bf16.msra.mxu0 %v316
        %320 = vmatprep.subr.bf16.mxu0 0
        %321 = vmatpush1.bf16.msra.mxu0 0
        %322 = vmatprep.subr.bf16.mxu0 0
        %323 = vmatpush1.bf16.msra.mxu0 0
        %324 = vmatprep.subr.bf16.mxu0 0
        %325 = vmatpush1.bf16.msra.mxu0 0
        %326 = vmatprep.subr.bf16.mxu0 0
        %327 = vmatpush1.bf16.msra.mxu0 0
        %328 = vmatprep.subr.bf16.mxu0 0
        %329 = vmatpush1.bf16.msra.mxu0 0
        %330 = vmatprep.subr.bf16.mxu0 0
        %331 = vmatpush1.bf16.msra.mxu0 0
        %332 = vmatprep.subr.bf16.mxu0 0
        %333 = vmatpush1.bf16.msra.mxu0 0
        %334 = vmatprep.subr.bf16.mxu0 0
        %335 = vmatpush1.bf16.msra.mxu0 0
        %336 = vmatprep.subr.bf16.mxu0 0
        %337 = vmatpush1.bf16.msra.mxu0 0
        %338 = vmatprep.subr.bf16.mxu0 0
        %339 = vmatpush1.bf16.msra.mxu0 0
        %340 = vmatprep.subr.bf16.mxu0 0
        %341 = vmatpush1.bf16.msra.mxu0 0
        %342 = vmatprep.subr.bf16.mxu0 0
        %343 = vmatpush1.bf16.msra.mxu0 0
        %344 = vmatprep.subr.bf16.mxu0 0
        %345 = vmatpush1.bf16.msra.mxu0 0
        %346 = vmatprep.subr.bf16.mxu0 0
        %347 = vmatpush1.bf16.msra.mxu0 0
        %348 = vmatprep.subr.bf16.mxu0 0
        %349 = vmatpush1.bf16.msra.mxu0 0
        %350 = vmatprep.mubr.bf16.mxu0 0
        %351 = vmatmul.mubr.bf16.gmra.mrb[0].mxu0 %v258
        %v352 = vpop.f32.mrb[0].mxu0
        %v353 = vadd.f32 0.0, %v352
        %v354 = vpop.f32.mrb[0].mxu0
        %v355 = vpop.f32.mrb[0].mxu0
        %v356 = vadd.f32 0.0, %v355
        %v357 = vpop.f32.mrb[0].mxu0
        %358 = vmatprep.mubr.bf16.mxu0 0
        %359 = vmatmul.mubr.bf16.gmra.mrb[0].mxu0 %v261
        %v360 = vpop.f32.mrb[0].mxu0
        %v361 = vadd.f32 0.0, %v360
        %v362 = vpop.f32.mrb[0].mxu0
        %v363 = vpop.f32.mrb[0].mxu0
        %v364 = vadd.f32 0.0, %v363
        %v365 = vpop.f32.mrb[0].mxu0
        %366 = vdwg.mxu0
        %v369 = vunpack.c.l.b16 %v238
        %v370 = vunpack.c.l.b16 %v239
        %v371 = vpack.c.b16 %v370, %v369
        %373 = vmatprep.subr.bf16.mxu0 0
        %374 = vmatpush1.bf16.msra.mxu0 %v371
        %375 = vmatprep.subr.bf16.mxu0 0
        %376 = vmatpush1.bf16.msra.mxu0 0
        %377 = vmatprep.subr.bf16.mxu0 0
        %378 = vmatpush1.bf16.msra.mxu0 0
        %379 = vmatprep.subr.bf16.mxu0 0
        %380 = vmatpush1.bf16.msra.mxu0 0
        %381 = vmatprep.subr.bf16.mxu0 0
        %382 = vmatpush1.bf16.msra.mxu0 0
        %383 = vmatprep.subr.bf16.mxu0 0
        %384 = vmatpush1.bf16.msra.mxu0 0
        %385 = vmatprep.subr.bf16.mxu0 0
        %386 = vmatpush1.bf16.msra.mxu0 0
        %387 = vmatprep.subr.bf16.mxu0 0
        %388 = vmatpush1.bf16.msra.mxu0 0
        %389 = vmatprep.subr.bf16.mxu0 0
        %390 = vmatpush1.bf16.msra.mxu0 0
        %391 = vmatprep.subr.bf16.mxu0 0
        %392 = vmatpush1.bf16.msra.mxu0 0
        %393 = vmatprep.subr.bf16.mxu0 0
        %394 = vmatpush1.bf16.msra.mxu0 0
        %395 = vmatprep.subr.bf16.mxu0 0
        %396 = vmatpush1.bf16.msra.mxu0 0
        %397 = vmatprep.subr.bf16.mxu0 0
        %398 = vmatpush1.bf16.msra.mxu0 0
        %399 = vmatprep.subr.bf16.mxu0 0
        %400 = vmatpush1.bf16.msra.mxu0 0
        %401 = vmatprep.subr.bf16.mxu0 0
        %402 = vmatpush1.bf16.msra.mxu0 0
        %403 = vmatprep.subr.bf16.mxu0 0
        %404 = vmatpush1.bf16.msra.mxu0 0
        %405 = vmatprep.mubr.bf16.mxu0 0
        %406 = vmatmul.mubr.bf16.gmra.mrb[0].mxu0 %v258
        %v407 = vpop.f32.mrb[0].mxu0
        %v408 = vadd.f32 0.0, %v407
        %v409 = vpop.f32.mrb[0].mxu0
        %v410 = vpop.f32.mrb[0].mxu0
        %v411 = vadd.f32 0.0, %v410
        %v412 = vpop.f32.mrb[0].mxu0
        %413 = vmatprep.mubr.bf16.mxu0 0
        %414 = vmatmul.mubr.bf16.gmra.mrb[0].mxu0 %v261
        %v415 = vpop.f32.mrb[0].mxu0
        %v416 = vadd.f32 0.0, %v415
        %v417 = vpop.f32.mrb[0].mxu0
        %v418 = vpop.f32.mrb[0].mxu0
        %v419 = vadd.f32 0.0, %v418
        %v420 = vpop.f32.mrb[0].mxu0
        %421 = vdwg.mxu0
        %v422 = vpack.c.bf16 %v301, %v298
        %v423 = vpack.c.bf16 %v309, %v306
        %v424 = vpack.c.bf16 %v356, %v353
        %v425 = vpack.c.bf16 %v364, %v361
        %v426 = vpack.c.bf16 %v411, %v408
        %v427 = vpack.c.bf16 %v419, %v416
        %v430 = vunpack.c.l.b16 %v226
        %v431 = vunpack.c.l.b16 %v227
        %v432 = vpack.c.b16 %v431, %v430
        %v435 = vsel %vm256, %v422, 0
        %v438 = vsel %vm256, %v423, 0
        %v441 = vsel %vm256, %v424, 0
        %v444 = vsel %vm256, %v425, 0
        %v447 = vsel %vm256, %v426, 0
        %v450 = vsel %vm256, %v427, 0
        %452 = vmatprep.subr.bf16.mxu0 0
        %453 = vmatpush1.bf16.msra.mxu0 %v432
        %454 = vmatprep.subr.bf16.mxu0 0
        %455 = vmatpush1.bf16.msra.mxu0 0
        %456 = vmatprep.subr.bf16.mxu0 0
        %457 = vmatpush1.bf16.msra.mxu0 0
        %458 = vmatprep.subr.bf16.mxu0 0
        %459 = vmatpush1.bf16.msra.mxu0 0
        %460 = vmatprep.subr.bf16.mxu0 0
        %461 = vmatpush1.bf16.msra.mxu0 0
        %462 = vmatprep.subr.bf16.mxu0 0
        %463 = vmatpush1.bf16.msra.mxu0 0
        %464 = vmatprep.subr.bf16.mxu0 0
        %465 = vmatpush1.bf16.msra.mxu0 0
        %466 = vmatprep.subr.bf16.mxu0 0
        %467 = vmatpush1.bf16.msra.mxu0 0
        %468 = vmatprep.subr.bf16.mxu0 0
        %469 = vmatpush1.bf16.msra.mxu0 0
        %470 = vmatprep.subr.bf16.mxu0 0
        %471 = vmatpush1.bf16.msra.mxu0 0
        %472 = vmatprep.subr.bf16.mxu0 0
        %473 = vmatpush1.bf16.msra.mxu0 0
        %474 = vmatprep.subr.bf16.mxu0 0
        %475 = vmatpush1.bf16.msra.mxu0 0
        %476 = vmatprep.subr.bf16.mxu0 0
        %477 = vmatpush1.bf16.msra.mxu0 0
        %478 = vmatprep.subr.bf16.mxu0 0
        %479 = vmatpush1.bf16.msra.mxu0 0
        %480 = vmatprep.subr.bf16.mxu0 0
        %481 = vmatpush1.bf16.msra.mxu0 0
        %482 = vmatprep.subr.bf16.mxu0 0
        %483 = vmatpush1.bf16.msra.mxu0 0
        %484 = vmatprep.mubr.bf16.mxu0 0
        %485 = vmatmul.mubr.bf16.gmra.mrb[0].mxu0 %v435
        %v486 = vpop.f32.mrb[0].mxu0
        %v487 = vadd.f32 0.0, %v486
        %v488 = vpop.f32.mrb[0].mxu0
        %v489 = vpop.f32.mrb[0].mxu0
        %v490 = vadd.f32 0.0, %v489
        %v491 = vpop.f32.mrb[0].mxu0
        %492 = vmatprep.mubr.bf16.mxu0 0
        %493 = vmatmul.mubr.bf16.gmra.mrb[0].mxu0 %v438
        %v494 = vpop.f32.mrb[0].mxu0
        %v495 = vadd.f32 0.0, %v494
        %v496 = vpop.f32.mrb[0].mxu0
        %v497 = vpop.f32.mrb[0].mxu0
        %v498 = vadd.f32 0.0, %v497
        %v499 = vpop.f32.mrb[0].mxu0
        %500 = vmatprep.mubr.bf16.mxu0 0
        %501 = vmatmul.mubr.bf16.gmra.mrb[0].mxu0 %v441
        %v502 = vpop.f32.mrb[0].mxu0
        %v503 = vadd.f32 0.0, %v502
        %v504 = vpop.f32.mrb[0].mxu0
        %v505 = vpop.f32.mrb[0].mxu0
        %v506 = vadd.f32 0.0, %v505
        %v507 = vpop.f32.mrb[0].mxu0
        %508 = vmatprep.mubr.bf16.mxu0 0
        %509 = vmatmul.mubr.bf16.gmra.mrb[0].mxu0 %v444
        %v510 = vpop.f32.mrb[0].mxu0
        %v511 = vadd.f32 0.0, %v510
        %v512 = vpop.f32.mrb[0].mxu0
        %v513 = vpop.f32.mrb[0].mxu0
        %v514 = vadd.f32 0.0, %v513
        %v515 = vpop.f32.mrb[0].mxu0
        %516 = vmatprep.mubr.bf16.mxu0 0
        %517 = vmatmul.mubr.bf16.gmra.mrb[0].mxu0 %v447
        %v518 = vpop.f32.mrb[0].mxu0
        %v519 = vadd.f32 0.0, %v518
        %v520 = vpop.f32.mrb[0].mxu0
        %v521 = vpop.f32.mrb[0].mxu0
        %v522 = vadd.f32 0.0, %v521
        %v523 = vpop.f32.mrb[0].mxu0
        %524 = vmatprep.mubr.bf16.mxu0 0
        %525 = vmatmul.mubr.bf16.gmra.mrb[0].mxu0 %v450
        %v526 = vpop.f32.mrb[0].mxu0
        %v527 = vadd.f32 0.0, %v526
        %v528 = vpop.f32.mrb[0].mxu0
        %v529 = vpop.f32.mrb[0].mxu0
        %v530 = vadd.f32 0.0, %v529
        %v531 = vpop.f32.mrb[0].mxu0
        %532 = vdwg.mxu0
        %v533 = vmul.f32 %v487, 0.017124753
        %v534 = vmul.f32 %v490, 0.017124753
        %v535 = vmul.f32 %v495, 0.017124753
        %v536 = vmul.f32 %v498, 0.017124753
        %v537 = vsub.f32 %v533, 2.117904
        %v538 = vsub.f32 %v534, 2.117904
        %v539 = vsub.f32 %v535, 2.117904
        %v540 = vsub.f32 %v536, 2.117904
        %vm541 = vcmask 261120
        %542 = vst.msk [vmem:[%s208] sm:$0xff] %vm541, %v537
        %543 = vst.msk [vmem:[%s208 + $0x8] sm:$0xff] %vm541, %v538
        %544 = vst.msk [vmem:[%s208 + $0x10] sm:$0xff] %vm541, %v539
        %545 = vst.msk [vmem:[%s208 + $0x18] sm:$0xff] %vm541, %v540
        %v546 = vmul.f32 %v503, 0.017507002
        %v547 = vmul.f32 %v506, 0.017507002
        %v548 = vmul.f32 %v511, 0.017507002
        %v549 = vmul.f32 %v514, 0.017507002
        %v550 = vsub.f32 %v546, 2.0357141
        %v551 = vsub.f32 %v547, 2.0357141
        %v552 = vsub.f32 %v548, 2.0357141
        %v553 = vsub.f32 %v549, 2.0357141
        %s554 = scalar_lea.vmem %s208, 32 [#allocation5]
        %555 = vst.msk [vmem:[%s554] sm:$0xff] %vm541, %v550
        %556 = vst.msk [vmem:[%s554 + $0x8] sm:$0xff] %vm541, %v551
        %557 = vst.msk [vmem:[%s554 + $0x10] sm:$0xff] %vm541, %v552
        %558 = vst.msk [vmem:[%s554 + $0x18] sm:$0xff] %vm541, %v553
        %v559 = vmul.f32 %v519, 0.017429193
        %v560 = vmul.f32 %v522, 0.017429193
        %v561 = vmul.f32 %v527, 0.017429193
        %v562 = vmul.f32 %v530, 0.017429193
        %v563 = vsub.f32 %v559, 1.8044444
        %v564 = vsub.f32 %v560, 1.8044444
        %v565 = vsub.f32 %v561, 1.8044444
        %v566 = vsub.f32 %v562, 1.8044444
        %s567 = scalar_lea.vmem %s208, 64 [#allocation5]
        %568 = vst.msk [vmem:[%s567] sm:$0xff] %vm541, %v563
        %569 = vst.msk [vmem:[%s567 + $0x8] sm:$0xff] %vm541, %v564
        %570 = vst.msk [vmem:[%s567 + $0x10] sm:$0xff] %vm541, %v565
        %571 = vst.msk [vmem:[%s567 + $0x18] sm:$0xff] %vm541, %v566
        %s572 = sand.u32 %s113, 1
        %s573 = scalar_lea.sflag [#allocation4], %s572
        %s574 = sand.u32 %s113, 1
        %s575 = smul.addr %s574, 96
        %s576 = scalar_lea.vmem [#allocation5], %s575
        // Predicated region
        $region37: #{tpu_custom_call.1} parent=31 // pred_check
          %p577 = pneg %p123
        $region38: #{tpu_custom_call.1} parent=31 // pred_check_branch
          %579 = sbr.rel (%p577) target = $region40
        $region39: #{tpu_custom_call.1} parent=31 // pred_region
          %s580 = smul.u32 4, %s23
          %s582 = ssub.s32 1536, 1536
          %583 = vsyncadd %s573, %s582
          %s584 = smul.addr %s22, 12
          %s585 = sadd.s32 %s580, %s584
          %s586 = smul.addr %s585, 128
          %s587 = scalar_lea.hbm %s3, %s586
          %s588 = sshll.u32 %s576, 4
          %s589 = int_to_ptr.vmem [resolvable:$true] %s588
          %594 = dma.vmem_to_hbm [thread:$0]  %s589, 1536, %s587, %s573, 128, 128, 8
        $region40: #{tpu_custom_call.1} parent=31 // pred_fallthru
          _
      $region32: #{tpu_custom_call.1} parent=5 // pred_fallthru
        _
      %p595 = scmp.le.s32.totalorder 2, %s13
      // Predicated region
      $region41: #{tpu_custom_call.1} parent=5 // pred_check
        %p596 = pneg %p595
      $region42: #{tpu_custom_call.1} parent=5 // pred_check_branch
        %598 = sbr.rel (%p596) target = $region44
      $region43: #{tpu_custom_call.1} parent=5 // pred_region
        %s599 = ssub.s32 %s13, 2
        // Predicated region
        $region45: #{tpu_custom_call.1} parent=43 // pred_check
          %p600 = pneg %p129
        $region46: #{tpu_custom_call.1} parent=43 // pred_check_branch
          %602 = sbr.rel (%p600) target = $region48
        $region47: #{tpu_custom_call.1} parent=43 // pred_region
          %s603 = sand.u32 %s114, 1
          %s604 = scalar_lea.sflag [#allocation4], %s603
          %s605 = sand.u32 %s114, 1
          %s606 = smul.addr %s605, 96
          %s607 = scalar_lea.vmem [#allocation5], %s606
          %608 = dma.done %s604, 1536
        $region48: #{tpu_custom_call.1} parent=43 // pred_fallthru
          _
      $region44: #{tpu_custom_call.1} parent=5 // pred_fallthru
        _
    $region6: #{tpu_custom_call.1} parent=1 // loop_footer
      %s17 = sadd.s32 1, %s13
    $region7: #{tpu_custom_call.1} parent=1 // loop_footer_branch
      %12 = sbr.rel target = $region3
    $region8: #{tpu_custom_call.1} parent=1 // loop_exit
      _
    %609 = vsyncpa [#allocation3], 1
    %s610 = scalar_lea.sflag [#allocation3], 1
    %611 = vsyncpa %s610, 1
    %612 = vsyncpa [#allocation4], 1
    %s613 = scalar_lea.sflag [#allocation4], 1
    %614 = vsyncpa %s613, 1

</llo_original>
